<compile_context>
chip_gen: v7x
topology: tpu7x:2x2x1
jax: 0.10.0
libtpu: 0.0.40
codegen_flags: <defaults>
</compile_context>

<pallas_src>
import jax
import jax.numpy as jnp
from jax import lax
from jax.experimental import pallas as pl
from jax.experimental.pallas import tpu as pltpu


def _round_up(x, m):
    return (x + m - 1) // m * m


def _make_dice_kernel(C, tb, B, n_half, has_ragged):
    """Builds the streaming dice partial-sum kernel with static constants baked in."""

    def kernel(x_ref, lab_ref, inter_ref, ein_ref, elab_ref):
        p_idx = pl.program_id(0)          # "parallel" half (v7x 2-TensorCore split)
        j = pl.program_id(1)              # sequential reduction step within the half
        t = p_idx * n_half + j            # global batch-tile index

        @pl.when(j == 0)
        def _init():
            inter_ref[...] = jnp.zeros_like(inter_ref)
            ein_ref[...] = jnp.zeros_like(ein_ref)
            elab_ref[...] = jnp.zeros_like(elab_ref)

        x = x_ref[...].astype(jnp.float32)     # (C, TB) logits, classes on sublanes
        lab = lab_ref[...]                     # (1, TB) int32 class indices

        # Softmax over the class (sublane) axis.  EUP approx reciprocal + one Newton step
        # on the (1, TB) denominator row -> near-exact at negligible VPU cost.
        m = jnp.max(x, axis=0, keepdims=True)                    # (1, TB)
        e = jnp.exp(x - m)                                       # (C, TB)
        denom = jnp.sum(e, axis=0, keepdims=True)                # (1, TB)
        r = pl.reciprocal(denom, approx=True)
        r = r * (2.0 - denom * r)                                # Newton refinement
        prob = e * r                                             # (C, TB)

        cls = lax.broadcasted_iota(jnp.int32, (C, tb), 0)        # (C, TB)
        onehot_b = cls == lab                                    # (C, TB) bool

        def accumulate(pv, oh):
            inter_ref[...] += jnp.sum(pv * oh, axis=1, keepdims=True)   # (C, 1)
            ein_ref[...] += jnp.sum(pv, axis=1, keepdims=True)          # (C, 1)
            elab_ref[...] += jnp.sum(oh, axis=1, keepdims=True)         # (C, 1)

        if has_ragged:
            full = (t + 1) * tb <= B

            @pl.when(full)
            def _full_tile():          # fast path: no mask math on full tiles
                accumulate(prob, onehot_b.astype(jnp.float32))

            @pl.when(jnp.logical_not(full))
            def _ragged_tile():        # ragged/empty tile: where-based masks (NaN-safe)
                col = lax.broadcasted_iota(jnp.int32, (1, tb), 1) + t * tb
                valid = col < B                                   # (1, TB) bool
                pv = jnp.where(valid, prob, 0.0)                  # select, kills garbage/NaN
                oh = jnp.where(valid & onehot_b, 1.0, 0.0)
                accumulate(pv, oh)
        else:
            accumulate(prob, onehot_b.astype(jnp.float32))

    return kernel


def dice_loss(logits, labels, alpha=None, tb=None):
    """logits: (B, C) float; labels: (B,)/(B,1)/(1,B) int; alpha: None | float | list/array(C)."""
    B, C = logits.shape
    itemsize = jnp.dtype(logits.dtype).itemsize

    # Lane-dense layout: batch on lanes, classes on sublanes.  The transpose is one extra
    # HBM pass, required because the module contract takes (B, C) logits; if the producer
    # can emit channel-major (C, B) activations, feed them directly and skip it.
    x = logits.T                                        # (C, B)
    lab = labels.reshape(1, -1).astype(jnp.int32)       # (1, B)

    # Batch-axis tile: multi-MiB so the ~0.35 us per-grid-step overhead amortizes, sized from
    # a double-buffered VMEM budget that stays well under the 32 MiB scoped default (v7x-safe).
    if tb is None:
        sub = 8 * 4 // max(1, itemsize)                 # sublane multiple for this dtype
        c_pad = _round_up(C, sub)
        per_col = 2 * (c_pad * itemsize + 8 * 4)        # 2x-buffered logits + (1,TB) int32 labels
        vmem_budget = 20 * 1024 * 1024
        tb = vmem_budget // per_col
    tb = max(128, (tb // 128) * 128)
    tb = min(tb, _round_up(B, 128))

    n_blocks = pl.cdiv(B, tb)
    n_half = pl.cdiv(n_blocks, 2)        # sequential steps per "core" half
    has_ragged = not (B % tb == 0 and n_blocks % 2 == 0)

    kernel = _make_dice_kernel(C, tb, B, n_half, has_ragged)

    def in_idx(p, j):
        # Clamp fully-out-of-range tiles (odd n_blocks) to the last valid block; their
        # contribution is zeroed by the in-kernel validity mask.
        return (0, jnp.minimum(p * n_half + j, n_blocks - 1))

    part_shape = jax.ShapeDtypeStruct((2, C, 1), jnp.float32)
    out_spec = pl.BlockSpec((None, C, 1), lambda p, j: (p, 0, 0))

    cost = pl.CostEstimate(
        flops=int(10 * B * C),
        transcendentals=int(B * C + B),
        bytes_accessed=int(B * C * itemsize + B * 4 + 3 * 2 * C * 4),
    )

    inter, e_in, e_lab = pl.pallas_call(
        kernel,
        out_shape=(part_shape, part_shape, part_shape),
        grid=(2, n_half),
        in_specs=[
            pl.BlockSpec((C, tb), in_idx),      # logits tile (C, TB)
            pl.BlockSpec((1, tb), in_idx),      # labels tile (1, TB)
        ],
        out_specs=(out_spec, out_spec, out_spec),
        compiler_params=pltpu.CompilerParams(
            dimension_semantics=("parallel", "arbitrary")),
        cost_estimate=cost,
    )(x, lab)

    # Tiny (C,)-sized finalize: combine per-core partials, dice ratio, alpha, sum.
    inter = jnp.sum(inter[..., 0], axis=0)              # (C,)
    e_in = jnp.sum(e_in[..., 0], axis=0)
    e_lab = jnp.sum(e_lab[..., 0], axis=0)
    loss = 1.0 - (2.0 * inter + 1.0) / (e_in + e_lab + 1.0)
    if alpha is not None:
        if isinstance(alpha, float):
            alpha_arr = jnp.array([alpha, 1.0 - alpha], dtype=jnp.float32)
        else:
            alpha_arr = jnp.asarray(alpha, dtype=jnp.float32)
        loss = loss * alpha_arr
    return jnp.sum(loss)


def _dice_loss_ref(logits, labels, alpha=None):
    """Pure-JAX reference replicating the PyTorch forward."""
    p = jax.nn.softmax(logits.astype(jnp.float32), axis=1)
    onehot = jax.nn.one_hot(labels.reshape(-1), logits.shape[1], dtype=jnp.float32)
    inter = jnp.sum(p * onehot, axis=0)
    e_in = jnp.sum(p, axis=0)
    e_lab = jnp.sum(onehot, axis=0)
    loss = 1.0 - (2.0 * inter + 1.0) / (e_in + e_lab + 1.0)
    if alpha is not None:
        if isinstance(alpha, float):
            alpha = [alpha, 1.0 - alpha]
        loss = loss * jnp.asarray(alpha, dtype=jnp.float32)
    return jnp.sum(loss)


if __name__ == "__main__":
    num_class = 4
    batch = 8
    alpha = [0.4, 0.3, 0.2, 0.1]

    key = jax.random.PRNGKey(0)
    k1, k2, k3, k4 = jax.random.split(key, 4)
    logits = jax.random.normal(k1, (batch, num_class), dtype=jnp.float32)
    labels = jax.random.randint(k2, (batch,), 0, num_class, dtype=jnp.int32)

    out = jax.block_until_ready(dice_loss(logits, labels, alpha))
    ref = jax.block_until_ready(_dice_loss_ref(logits, labels, alpha))
    assert jnp.allclose(out, ref, atol=1e-4, rtol=1e-4), (out, ref)

    # Second check: batch not a multiple of the tile, multiple grid steps per core half,
    # one ragged tile and one fully-empty (clamped) tile -> exercises both accumulation
    # paths, the in-kernel masking (no wrapper pad) and the per-core partial combine.
    b2 = 300
    logits2 = jax.random.normal(k3, (b2, num_class), dtype=jnp.float32)
    labels2 = jax.random.randint(k4, (b2,), 0, num_class, dtype=jnp.int32)
    out2 = jax.block_until_ready(dice_loss(logits2, labels2, alpha, tb=128))
    ref2 = jax.block_until_ready(_dice_loss_ref(logits2, labels2, alpha))
    assert jnp.allclose(out2, ref2, atol=1e-4, rtol=1e-4), (out2, ref2)

    # Third check: alpha=None path (no weighting), default (large) tile selection.
    out3 = jax.block_until_ready(dice_loss(logits2, labels2, None))
    ref3 = jax.block_until_ready(_dice_loss_ref(logits2, labels2, None))
    assert jnp.allclose(out3, ref3, atol=1e-4, rtol=1e-4), (out3, ref3)

    print("KERNEL_OK")
</pallas_src>

<mosaic_0001>
module attributes {stable_mosaic.version = 11 : i64} {
  func.func @kernel(%arg0: i32, %arg1: i32, %arg2: memref<4x128xf32, #tpu.memory_space<vmem>>, %arg3: memref<1x128xi32, #tpu.memory_space<vmem>>, %arg4: memref<1x4x1xf32, #tpu.memory_space<vmem>>, %arg5: memref<1x4x1xf32, #tpu.memory_space<vmem>>, %arg6: memref<1x4x1xf32, #tpu.memory_space<vmem>>) attributes {dimension_semantics = [#tpu.dimension_semantics<parallel>, #tpu.dimension_semantics<arbitrary>], iteration_bounds = array<i64: 2, 1>, scalar_prefetch = 0 : i64, scratch_operands = 0 : i64, tpu.core_type = #tpu.core_type<tc>, window_params = [{transform_indices = @transform_0, window_bounds = array<i64: 4, 128>}, {transform_indices = @transform_1, window_bounds = array<i64: 1, 128>}, {transform_indices = @transform_2, window_bounds = array<i64: 1, 4, 1>}, {transform_indices = @transform_3, window_bounds = array<i64: 1, 4, 1>}, {transform_indices = @transform_4, window_bounds = array<i64: 1, 4, 1>}]} {
    %c1_i32 = arith.constant 1 : i32
    %0 = arith.muli %arg0, %c1_i32 : i32
    %1 = arith.addi %0, %arg1 : i32
    %c0_i32 = arith.constant 0 : i32
    %2 = arith.cmpi eq, %arg1, %c0_i32 : i32
    %3 = arith.extui %2 : i1 to i32
    %c0_i32_0 = arith.constant 0 : i32
    %4 = arith.cmpi ne, %3, %c0_i32_0 : i32
    scf.if %4 {
      %cst_9 = arith.constant 0.000000e+00 : f32
      %32 = vector.broadcast %cst_9 : f32 to vector<4x1xf32>
      %c0_10 = arith.constant 0 : index
      %c0_11 = arith.constant 0 : index
      %c0_12 = arith.constant 0 : index
      %33 = vector.load %arg4[%c0_10, %c0_11, %c0_12] : memref<1x4x1xf32, #tpu.memory_space<vmem>>, vector<1x4x1xf32>
      %34 = vector.shape_cast %33 : vector<1x4x1xf32> to vector<4x1xf32>
      %35 = vector.shape_cast %32 : vector<4x1xf32> to vector<1x4x1xf32>
      tpu.vector_store %arg4[%c0_10, %c0_11, %c0_12], %35 {strides = array<i32>} : memref<1x4x1xf32, #tpu.memory_space<vmem>>, vector<1x4x1xf32>,
      %cst_13 = arith.constant 0.000000e+00 : f32
      %36 = vector.broadcast %cst_13 : f32 to vector<4x1xf32>
      %c0_14 = arith.constant 0 : index
      %c0_15 = arith.constant 0 : index
      %c0_16 = arith.constant 0 : index
      %37 = vector.load %arg5[%c0_14, %c0_15, %c0_16] : memref<1x4x1xf32, #tpu.memory_space<vmem>>, vector<1x4x1xf32>
      %38 = vector.shape_cast %37 : vector<1x4x1xf32> to vector<4x1xf32>
      %39 = vector.shape_cast %36 : vector<4x1xf32> to vector<1x4x1xf32>
      tpu.vector_store %arg5[%c0_14, %c0_15, %c0_16], %39 {strides = array<i32>} : memref<1x4x1xf32, #tpu.memory_space<vmem>>, vector<1x4x1xf32>,
      %cst_17 = arith.constant 0.000000e+00 : f32
      %40 = vector.broadcast %cst_17 : f32 to vector<4x1xf32>
      %c0_18 = arith.constant 0 : index
      %c0_19 = arith.constant 0 : index
      %c0_20 = arith.constant 0 : index
      %41 = vector.load %arg6[%c0_18, %c0_19, %c0_20] : memref<1x4x1xf32, #tpu.memory_space<vmem>>, vector<1x4x1xf32>
      %42 = vector.shape_cast %41 : vector<1x4x1xf32> to vector<4x1xf32>
      %43 = vector.shape_cast %40 : vector<4x1xf32> to vector<1x4x1xf32>
      tpu.vector_store %arg6[%c0_18, %c0_19, %c0_20], %43 {strides = array<i32>} : memref<1x4x1xf32, #tpu.memory_space<vmem>>, vector<1x4x1xf32>,
    } else {
    }
    %c0 = arith.constant 0 : index
    %c0_1 = arith.constant 0 : index
    %5 = vector.load %arg2[%c0, %c0_1] : memref<4x128xf32, #tpu.memory_space<vmem>>, vector<4x128xf32>
    %c0_2 = arith.constant 0 : index
    %c0_3 = arith.constant 0 : index
    %6 = vector.load %arg3[%c0_2, %c0_3] : memref<1x128xi32, #tpu.memory_space<vmem>>, vector<1x128xi32>
    %cst = arith.constant dense<0xFF800000> : vector<128xf32>
    %7 = vector.multi_reduction <maximumf>, %5, %cst [0] : vector<4x128xf32> to vector<128xf32>
    %8 = vector.shape_cast %7 : vector<128xf32> to vector<1x128xf32>
    %9 = vector.broadcast %8 : vector<1x128xf32> to vector<4x128xf32>
    %10 = arith.subf %5, %9 : vector<4x128xf32>
    %11 = math.exp %10 : vector<4x128xf32>
    %cst_4 = arith.constant dense<0.000000e+00> : vector<128xf32>
    %12 = vector.multi_reduction <add>, %11, %cst_4 [0] : vector<4x128xf32> to vector<128xf32>
    %13 = vector.shape_cast %12 : vector<128xf32> to vector<1x128xf32>
    %14 = tpu.reciprocal %13 {approx = true} : vector<1x128xf32> -> vector<1x128xf32>
    %15 = arith.mulf %13, %14 : vector<1x128xf32>
    %cst_5 = arith.constant 2.000000e+00 : f32
    %16 = vector.broadcast %cst_5 : f32 to vector<1x128xf32>
    %17 = arith.subf %16, %15 : vector<1x128xf32>
    %18 = arith.mulf %14, %17 : vector<1x128xf32>
    %19 = vector.broadcast %18 : vector<1x128xf32> to vector<4x128xf32>
    %20 = arith.mulf %11, %19 : vector<4x128xf32>
    %21 = tpu.iota {dimensions = array<i32: 0>} : vector<4x128xi32>
    %22 = vector.broadcast %6 : vector<1x128xi32> to vector<4x128xi32>
    %23 = arith.cmpi eq, %21, %22 : vector<4x128xi32>
    %c1_i32_6 = arith.constant 1 : i32
    %24 = arith.addi %1, %c1_i32_6 : i32
    %c128_i32 = arith.constant 128 : i32
    %25 = arith.muli %24, %c128_i32 : i32
    %c8_i32 = arith.constant 8 : i32
    %26 = arith.cmpi sle, %25, %c8_i32 : i32
    %27 = arith.extui %26 : i1 to i32
    %c0_i32_7 = arith.constant 0 : i32
    %28 = arith.cmpi ne, %27, %c0_i32_7 : i32
    scf.if %28 {
      %32 = arith.extui %23 : vector<4x128xi1> to vector<4x128xi32>
      %33 = arith.sitofp %32 : vector<4x128xi32> to vector<4x128xf32>
      %c0_9 = arith.constant 0 : index
      %c0_10 = arith.constant 0 : index
      %c0_11 = arith.constant 0 : index
      %34 = vector.load %arg4[%c0_9, %c0_10, %c0_11] : memref<1x4x1xf32, #tpu.memory_space<vmem>>, vector<1x4x1xf32>
      %35 = vector.shape_cast %34 : vector<1x4x1xf32> to vector<4x1xf32>
      %36 = arith.mulf %20, %33 : vector<4x128xf32>
      %cst_12 = arith.constant dense<0.000000e+00> : vector<4xf32>
      %37 = vector.multi_reduction <add>, %36, %cst_12 [1] : vector<4x128xf32> to vector<4xf32>
      %38 = vector.shape_cast %37 : vector<4xf32> to vector<4x1xf32>
      %39 = arith.addf %35, %38 : vector<4x1xf32>
      %c0_13 = arith.constant 0 : index
      %c0_14 = arith.constant 0 : index
      %c0_15 = arith.constant 0 : index
      %40 = vector.load %arg4[%c0_13, %c0_14, %c0_15] : memref<1x4x1xf32, #tpu.memory_space<vmem>>, vector<1x4x1xf32>
      %41 = vector.shape_cast %40 : vector<1x4x1xf32> to vector<4x1xf32>
      %42 = vector.shape_cast %39 : vector<4x1xf32> to vector<1x4x1xf32>
      tpu.vector_store %arg4[%c0_13, %c0_14, %c0_15], %42 {strides = array<i32>} : memref<1x4x1xf32, #tpu.memory_space<vmem>>, vector<1x4x1xf32>,
      %c0_16 = arith.constant 0 : index
      %c0_17 = arith.constant 0 : index
      %c0_18 = arith.constant 0 : index
      %43 = vector.load %arg5[%c0_16, %c0_17, %c0_18] : memref<1x4x1xf32, #tpu.memory_space<vmem>>, vector<1x4x1xf32>
      %44 = vector.shape_cast %43 : vector<1x4x1xf32> to vector<4x1xf32>
      %cst_19 = arith.constant dense<0.000000e+00> : vector<4xf32>
      %45 = vector.multi_reduction <add>, %20, %cst_19 [1] : vector<4x128xf32> to vector<4xf32>
      %46 = vector.shape_cast %45 : vector<4xf32> to vector<4x1xf32>
      %47 = arith.addf %44, %46 : vector<4x1xf32>
      %c0_20 = arith.constant 0 : index
      %c0_21 = arith.constant 0 : index
      %c0_22 = arith.constant 0 : index
      %48 = vector.load %arg5[%c0_20, %c0_21, %c0_22] : memref<1x4x1xf32, #tpu.memory_space<vmem>>, vector<1x4x1xf32>
      %49 = vector.shape_cast %48 : vector<1x4x1xf32> to vector<4x1xf32>
      %50 = vector.shape_cast %47 : vector<4x1xf32> to vector<1x4x1xf32>
      tpu.vector_store %arg5[%c0_20, %c0_21, %c0_22], %50 {strides = array<i32>} : memref<1x4x1xf32, #tpu.memory_space<vmem>>, vector<1x4x1xf32>,
      %c0_23 = arith.constant 0 : index
      %c0_24 = arith.constant 0 : index
      %c0_25 = arith.constant 0 : index
      %51 = vector.load %arg6[%c0_23, %c0_24, %c0_25] : memref<1x4x1xf32, #tpu.memory_space<vmem>>, vector<1x4x1xf32>
      %52 = vector.shape_cast %51 : vector<1x4x1xf32> to vector<4x1xf32>
      %cst_26 = arith.constant dense<0.000000e+00> : vector<4xf32>
      %53 = vector.multi_reduction <add>, %33, %cst_26 [1] : vector<4x128xf32> to vector<4xf32>
      %54 = vector.shape_cast %53 : vector<4xf32> to vector<4x1xf32>
      %55 = arith.addf %52, %54 : vector<4x1xf32>
      %c0_27 = arith.constant 0 : index
      %c0_28 = arith.constant 0 : index
      %c0_29 = arith.constant 0 : index
      %56 = vector.load %arg6[%c0_27, %c0_28, %c0_29] : memref<1x4x1xf32, #tpu.memory_space<vmem>>, vector<1x4x1xf32>
      %57 = vector.shape_cast %56 : vector<1x4x1xf32> to vector<4x1xf32>
      %58 = vector.shape_cast %55 : vector<4x1xf32> to vector<1x4x1xf32>
      tpu.vector_store %arg6[%c0_27, %c0_28, %c0_29], %58 {strides = array<i32>} : memref<1x4x1xf32, #tpu.memory_space<vmem>>, vector<1x4x1xf32>,
    } else {
    }
    %true = arith.constant true
    %29 = arith.xori %26, %true : i1
    %30 = arith.extui %29 : i1 to i32
    %c0_i32_8 = arith.constant 0 : i32
    %31 = arith.cmpi ne, %30, %c0_i32_8 : i32
    scf.if %31 {
      %32 = tpu.iota {dimensions = array<i32: 1>} : vector<1x128xi32>
      %c128_i32_9 = arith.constant 128 : i32
      %33 = arith.muli %1, %c128_i32_9 : i32
      %34 = vector.broadcast %33 : i32 to vector<1x128xi32>
      %35 = arith.addi %32, %34 : vector<1x128xi32>
      %c8_i32_10 = arith.constant 8 : i32
      %36 = vector.broadcast %c8_i32_10 : i32 to vector<1x128xi32>
      %37 = arith.cmpi slt, %35, %36 : vector<1x128xi32>
      %cst_11 = arith.constant 0.000000e+00 : f32
      %38 = vector.shape_cast %37 : vector<1x128xi1> to vector<1x128xi1>
      %39 = vector.broadcast %38 : vector<1x128xi1> to vector<4x128xi1>
      %40 = vector.broadcast %cst_11 : f32 to vector<4x128xf32>
      %41 = arith.select %39, %20, %40 : vector<4x128xi1>, vector<4x128xf32>
      %42 = vector.broadcast %37 : vector<1x128xi1> to vector<4x128xi1>
      %43 = arith.andi %42, %23 : vector<4x128xi1>
      %cst_12 = arith.constant 1.000000e+00 : f32
      %cst_13 = arith.constant 0.000000e+00 : f32
      %44 = vector.broadcast %cst_12 : f32 to vector<4x128xf32>
      %45 = vector.broadcast %cst_13 : f32 to vector<4x128xf32>
      %46 = arith.select %43, %44, %45 : vector<4x128xi1>, vector<4x128xf32>
      %c0_14 = arith.constant 0 : index
      %c0_15 = arith.constant 0 : index
      %c0_16 = arith.constant 0 : index
      %47 = vector.load %arg4[%c0_14, %c0_15, %c0_16] : memref<1x4x1xf32, #tpu.memory_space<vmem>>, vector<1x4x1xf32>
      %48 = vector.shape_cast %47 : vector<1x4x1xf32> to vector<4x1xf32>
      %49 = arith.mulf %41, %46 : vector<4x128xf32>
      %cst_17 = arith.constant dense<0.000000e+00> : vector<4xf32>
      %50 = vector.multi_reduction <add>, %49, %cst_17 [1] : vector<4x128xf32> to vector<4xf32>
      %51 = vector.shape_cast %50 : vector<4xf32> to vector<4x1xf32>
      %52 = arith.addf %48, %51 : vector<4x1xf32>
      %c0_18 = arith.constant 0 : index
      %c0_19 = arith.constant 0 : index
      %c0_20 = arith.constant 0 : index
      %53 = vector.load %arg4[%c0_18, %c0_19, %c0_20] : memref<1x4x1xf32, #tpu.memory_space<vmem>>, vector<1x4x1xf32>
      %54 = vector.shape_cast %53 : vector<1x4x1xf32> to vector<4x1xf32>
      %55 = vector.shape_cast %52 : vector<4x1xf32> to vector<1x4x1xf32>
      tpu.vector_store %arg4[%c0_18, %c0_19, %c0_20], %55 {strides = array<i32>} : memref<1x4x1xf32, #tpu.memory_space<vmem>>, vector<1x4x1xf32>,
      %c0_21 = arith.constant 0 : index
      %c0_22 = arith.constant 0 : index
      %c0_23 = arith.constant 0 : index
      %56 = vector.load %arg5[%c0_21, %c0_22, %c0_23] : memref<1x4x1xf32, #tpu.memory_space<vmem>>, vector<1x4x1xf32>
      %57 = vector.shape_cast %56 : vector<1x4x1xf32> to vector<4x1xf32>
      %cst_24 = arith.constant dense<0.000000e+00> : vector<4xf32>
      %58 = vector.multi_reduction <add>, %41, %cst_24 [1] : vector<4x128xf32> to vector<4xf32>
      %59 = vector.shape_cast %58 : vector<4xf32> to vector<4x1xf32>
      %60 = arith.addf %57, %59 : vector<4x1xf32>
      %c0_25 = arith.constant 0 : index
      %c0_26 = arith.constant 0 : index
      %c0_27 = arith.constant 0 : index
      %61 = vector.load %arg5[%c0_25, %c0_26, %c0_27] : memref<1x4x1xf32, #tpu.memory_space<vmem>>, vector<1x4x1xf32>
      %62 = vector.shape_cast %61 : vector<1x4x1xf32> to vector<4x1xf32>
      %63 = vector.shape_cast %60 : vector<4x1xf32> to vector<1x4x1xf32>
      tpu.vector_store %arg5[%c0_25, %c0_26, %c0_27], %63 {strides = array<i32>} : memref<1x4x1xf32, #tpu.memory_space<vmem>>, vector<1x4x1xf32>,
      %c0_28 = arith.constant 0 : index
      %c0_29 = arith.constant 0 : index
      %c0_30 = arith.constant 0 : index
      %64 = vector.load %arg6[%c0_28, %c0_29, %c0_30] : memref<1x4x1xf32, #tpu.memory_space<vmem>>, vector<1x4x1xf32>
      %65 = vector.shape_cast %64 : vector<1x4x1xf32> to vector<4x1xf32>
      %cst_31 = arith.constant dense<0.000000e+00> : vector<4xf32>
      %66 = vector.multi_reduction <add>, %46, %cst_31 [1] : vector<4x128xf32> to vector<4xf32>
      %67 = vector.shape_cast %66 : vector<4xf32> to vector<4x1xf32>
      %68 = arith.addf %65, %67 : vector<4x1xf32>
      %c0_32 = arith.constant 0 : index
      %c0_33 = arith.constant 0 : index
      %c0_34 = arith.constant 0 : index
      %69 = vector.load %arg6[%c0_32, %c0_33, %c0_34] : memref<1x4x1xf32, #tpu.memory_space<vmem>>, vector<1x4x1xf32>
      %70 = vector.shape_cast %69 : vector<1x4x1xf32> to vector<4x1xf32>
      %71 = vector.shape_cast %68 : vector<4x1xf32> to vector<1x4x1xf32>
      tpu.vector_store %arg6[%c0_32, %c0_33, %c0_34], %71 {strides = array<i32>} : memref<1x4x1xf32, #tpu.memory_space<vmem>>, vector<1x4x1xf32>,
    } else {
    }
    return
  }
  func.func @transform_0(%arg0: i32, %arg1: i32) -> (i32, i32) {
    %c1_i32 = arith.constant 1 : i32
    %0 = arith.muli %arg0, %c1_i32 : i32
    %1 = arith.addi %0, %arg1 : i32
    %c0_i32 = arith.constant 0 : i32
    %2 = arith.minsi %1, %c0_i32 : i32
    %c0_i32_0 = arith.constant 0 : i32
    %c0_i32_1 = arith.constant 0 : i32
    return %c0_i32_0, %2 : i32, i32
  }
  func.func @transform_1(%arg0: i32, %arg1: i32) -> (i32, i32) {
    %c1_i32 = arith.constant 1 : i32
    %0 = arith.muli %arg0, %c1_i32 : i32
    %1 = arith.addi %0, %arg1 : i32
    %c0_i32 = arith.constant 0 : i32
    %2 = arith.minsi %1, %c0_i32 : i32
    %c0_i32_0 = arith.constant 0 : i32
    %c0_i32_1 = arith.constant 0 : i32
    return %c0_i32_0, %2 : i32, i32
  }
  func.func @transform_2(%arg0: i32, %arg1: i32) -> (i32, i32, i32) {
    %c0_i32 = arith.constant 0 : i32
    %c0_i32_0 = arith.constant 0 : i32
    %c0_i32_1 = arith.constant 0 : i32
    return %arg0, %c0_i32, %c0_i32_0 : i32, i32, i32
  }
  func.func @transform_3(%arg0: i32, %arg1: i32) -> (i32, i32, i32) {
    %c0_i32 = arith.constant 0 : i32
    %c0_i32_0 = arith.constant 0 : i32
    %c0_i32_1 = arith.constant 0 : i32
    return %arg0, %c0_i32, %c0_i32_0 : i32, i32, i32
  }
  func.func @transform_4(%arg0: i32, %arg1: i32) -> (i32, i32, i32) {
    %c0_i32 = arith.constant 0 : i32
    %c0_i32_0 = arith.constant 0 : i32
    %c0_i32_1 = arith.constant 0 : i32
    return %arg0, %c0_i32, %c0_i32_0 : i32, i32, i32
  }
}

</mosaic_0001>

<llo_original>
// kernel: tpu_custom_call.1
$region0: #{tpu_custom_call.1}
  #allocation0 [shape = 'u32[]', space=smem, size = 0x4, offset = 0x4, fixed_abs, tag = 'smem constant byte address 0x4 - core index']
  #allocation1 [shape = 'u32[144,128]{1,0:T(1,128)}', space=vmem, size = 0x12000, scoped, tag = 'internal scratch']
  %s0 = inlined_call_operand.hbm [shape: f32[4,8], index: 0, kind: input, shape index: {}]
  %s1 = inlined_call_operand.vmem [shape: s32[1,8], index: 1, kind: input, shape index: {}]
  %s2 = inlined_call_operand.vmem [shape: f32[2,4,1], index: 2, kind: output, shape index: {0}]
  %s3 = inlined_call_operand.vmem [shape: f32[2,4,1], index: 3, kind: output, shape index: {1}]
  %s4 = inlined_call_operand.vmem [shape: f32[2,4,1], index: 4, kind: output, shape index: {2}]
  %5 = xla_tuple %s2, %s3, %s4
  %s6 = sld [smem:[#allocation0]]
  $region73: #{tpu_custom_call.1} parent=0
    _
  %s8 = ssub.s32 1, %s6
  %s9 = scalar_select 0, %s8, %s6
  $region1: #{tpu_custom_call.1} parent=0
    #allocation2 [shape = 'u8[4096]{0}', space=vmem, size = 0x1000, scoped, tag = 'input window, operand 0']
    #allocation3 [shape = 's32[2]{0}', space=sflag, size = 0x8, scoped, tag = 'scoped memory for tpu_custom_call.1']
    %10 = vsyncpa [#allocation3], 0
    %s11 = scalar_lea.sflag [#allocation3], 1
    %12 = vsyncpa %s11, 0
    loop: start=0, step=1, limit=4
    $region2: #{tpu_custom_call.1} parent=1 // loop_pre_header
      _
    $region3: #{tpu_custom_call.1} parent=1 // loop_header
      %s14 = sphi 0, %s18
      %p15 = scmp.ge.s32.totalorder %s14, 4
      %s21 = sphi 0, %s33
      %s22 = sphi 0, %s29
      %s23 = sphi 0, %s21
      %s24 = sphi 0, %s22
      %s25 = sphi 0, %s23
      %s26 = sphi 0, %s24
      %s42 = sphi 0, %s44
      %s45 = sphi 0, %s42
      %s46 = sphi 0, %s45
      %s62 = sphi 0, %s46
      %s74 = sphi 0, %s76
      %s77 = sphi 0, %s74
      %s78 = sphi 0, %s77
      %s94 = sphi 0, %s78
      %s100 = sphi 0, %s102
      %s103 = sphi 0, %s100
      %s104 = sphi 0, %s103
      %s120 = sphi 0, %s104
      %s126 = sphi 0, %s128
      %s129 = sphi 0, %s126
      %s130 = sphi 0, %s129
      %s146 = sphi 0, %s130
      %s152 = sphi 0, %s154
      %s155 = sphi 0, %s152
      %s156 = sphi 0, %s155
      %s172 = sphi 0, %s156
    $region4: #{tpu_custom_call.1} parent=1 // loop_header_branch
      %17 = sbr.rel (%p15) target = $region8
    $region5: #{tpu_custom_call.1} parent=1 // loop_body
      %s19 = ssub.s32 %s14, 1
      %s20 = ssub.s32 %s14, 2
      %s27 = sadd.s32 1, %s22
      %p28 = scmp.ge.s32.totalorder %s27, 1
      %s29 = scalar_select %p28, 0, %s27
      %s30 = sadd.s32 1, %s21
      %s31 = scalar_select %p28, %s30, %s21
      %p32 = scmp.ge.s32.totalorder %s31, 2
      %s33 = scalar_select %p32, 0, %s31
      %s34 = sadd.s32 %s21, %s22
      %p35 = scmp.lt.s32.totalorder %s34, 0
      %s36 = scalar_select %p35, %s34, 0
      %s37 = sadd.s32 %s33, %s29
      %p38 = scmp.lt.s32.totalorder %s37, 0
      %s39 = scalar_select %p38, %s37, 0
      %s40 = ssub.s32 %s36, %s39
      %p41 = scmp.eq.s32.totalorder %s40, 0
      %s43 = sadd.s32 %s42, 1
      %s44 = scalar_select %p41, %s42, %s43
      %p47 = pneg %p41
      %p48 = scmp.eq.s32.totalorder %s14, 1
      %p49 = por %p47, %p48
      %p50 = scmp.ne.s32.totalorder %s42, %s45
      %p51 = scmp.eq.s32.totalorder %s14, 0
      %p52 = por %p50, %p51
      %p53 = scmp.ne.s32.totalorder %s42, %s45
      %p54 = scmp.eq.s32.totalorder %s19, 1
      %p55 = por %p53, %p54
      %p56 = scmp.ne.s32.totalorder %s45, %s46
      %p57 = scmp.eq.s32.totalorder %s19, 0
      %p58 = por %p56, %p57
      %p59 = scmp.ne.s32.totalorder %s45, %s46
      %p60 = scmp.eq.s32.totalorder %s20, 1
      %p61 = por %p59, %p60
      %p63 = scmp.ne.s32.totalorder %s46, %s62
      %p64 = scmp.eq.s32.totalorder %s20, 0
      %p65 = por %p63, %p64
      %s66 = sadd.s32 %s21, %s22
      %p67 = scmp.lt.s32.totalorder %s66, 0
      %s68 = scalar_select %p67, %s66, 0
      %s69 = sadd.s32 %s33, %s29
      %p70 = scmp.lt.s32.totalorder %s69, 0
      %s71 = scalar_select %p70, %s69, 0
      %s72 = ssub.s32 %s68, %s71
      %p73 = scmp.eq.s32.totalorder %s72, 0
      %s75 = sadd.s32 %s74, 1
      %s76 = scalar_select %p73, %s74, %s75
      %p79 = pneg %p73
      %p80 = scmp.eq.s32.totalorder %s14, 1
      %p81 = por %p79, %p80
      %p82 = scmp.ne.s32.totalorder %s74, %s77
      %p83 = scmp.eq.s32.totalorder %s14, 0
      %p84 = por %p82, %p83
      %p85 = scmp.ne.s32.totalorder %s74, %s77
      %p86 = scmp.eq.s32.totalorder %s19, 1
      %p87 = por %p85, %p86
      %p88 = scmp.ne.s32.totalorder %s77, %s78
      %p89 = scmp.eq.s32.totalorder %s19, 0
      %p90 = por %p88, %p89
      %p91 = scmp.ne.s32.totalorder %s77, %s78
      %p92 = scmp.eq.s32.totalorder %s20, 1
      %p93 = por %p91, %p92
      %p95 = scmp.ne.s32.totalorder %s78, %s94
      %p96 = scmp.eq.s32.totalorder %s20, 0
      %p97 = por %p95, %p96
      %s98 = ssub.s32 %s21, %s33
      %p99 = scmp.eq.s32.totalorder %s98, 0
      %s101 = sadd.s32 %s100, 1
      %s102 = scalar_select %p99, %s100, %s101
      %p105 = pneg %p99
      %p106 = scmp.eq.s32.totalorder %s14, 1
      %p107 = por %p105, %p106
      %p108 = scmp.ne.s32.totalorder %s100, %s103
      %p109 = scmp.eq.s32.totalorder %s14, 0
      %p110 = por %p108, %p109
      %p111 = scmp.ne.s32.totalorder %s100, %s103
      %p112 = scmp.eq.s32.totalorder %s19, 1
      %p113 = por %p111, %p112
      %p114 = scmp.ne.s32.totalorder %s103, %s104
      %p115 = scmp.eq.s32.totalorder %s19, 0
      %p116 = por %p114, %p115
      %p117 = scmp.ne.s32.totalorder %s103, %s104
      %p118 = scmp.eq.s32.totalorder %s20, 1
      %p119 = por %p117, %p118
      %p121 = scmp.ne.s32.totalorder %s104, %s120
      %p122 = scmp.eq.s32.totalorder %s20, 0
      %p123 = por %p121, %p122
      %s124 = ssub.s32 %s21, %s33
      %p125 = scmp.eq.s32.totalorder %s124, 0
      %s127 = sadd.s32 %s126, 1
      %s128 = scalar_select %p125, %s126, %s127
      %p131 = pneg %p125
      %p132 = scmp.eq.s32.totalorder %s14, 1
      %p133 = por %p131, %p132
      %p134 = scmp.ne.s32.totalorder %s126, %s129
      %p135 = scmp.eq.s32.totalorder %s14, 0
      %p136 = por %p134, %p135
      %p137 = scmp.ne.s32.totalorder %s126, %s129
      %p138 = scmp.eq.s32.totalorder %s19, 1
      %p139 = por %p137, %p138
      %p140 = scmp.ne.s32.totalorder %s129, %s130
      %p141 = scmp.eq.s32.totalorder %s19, 0
      %p142 = por %p140, %p141
      %p143 = scmp.ne.s32.totalorder %s129, %s130
      %p144 = scmp.eq.s32.totalorder %s20, 1
      %p145 = por %p143, %p144
      %p147 = scmp.ne.s32.totalorder %s130, %s146
      %p148 = scmp.eq.s32.totalorder %s20, 0
      %p149 = por %p147, %p148
      %s150 = ssub.s32 %s21, %s33
      %p151 = scmp.eq.s32.totalorder %s150, 0
      %s153 = sadd.s32 %s152, 1
      %s154 = scalar_select %p151, %s152, %s153
      %p157 = pneg %p151
      %p158 = scmp.eq.s32.totalorder %s14, 1
      %p159 = por %p157, %p158
      %p160 = scmp.ne.s32.totalorder %s152, %s155
      %p161 = scmp.eq.s32.totalorder %s14, 0
      %p162 = por %p160, %p161
      %p163 = scmp.ne.s32.totalorder %s152, %s155
      %p164 = scmp.eq.s32.totalorder %s19, 1
      %p165 = por %p163, %p164
      %p166 = scmp.ne.s32.totalorder %s155, %s156
      %p167 = scmp.eq.s32.totalorder %s19, 0
      %p168 = por %p166, %p167
      %p169 = scmp.ne.s32.totalorder %s155, %s156
      %p170 = scmp.eq.s32.totalorder %s20, 1
      %p171 = por %p169, %p170
      %p173 = scmp.ne.s32.totalorder %s156, %s172
      %p174 = scmp.eq.s32.totalorder %s20, 0
      %p175 = por %p173, %p174
      %p176 = scmp.le.s32.totalorder 1, %s14
      %p177 = scmp.lt.s32.totalorder %s14, 3
      %p178 = pnand %p176, %p177
      %p179 = pneg %p178
      // Predicated region
      $region9: #{tpu_custom_call.1} parent=5 // pred_check
        _
      $region10: #{tpu_custom_call.1} parent=5 // pred_check_branch
        %181 = sbr.rel (%p178) target = $region12
      $region11: #{tpu_custom_call.1} parent=5 // pred_region
        %s182 = ssub.s32 %s14, 1
      $region12: #{tpu_custom_call.1} parent=5 // pred_fallthru
        _
      %p183 = scmp.lt.s32.totalorder %s14, 2
      // Predicated region
      $region13: #{tpu_custom_call.1} parent=5 // pred_check
        %p184 = pneg %p183
      $region14: #{tpu_custom_call.1} parent=5 // pred_check_branch
        %186 = sbr.rel (%p184) target = $region16
      $region15: #{tpu_custom_call.1} parent=5 // pred_region
        // Predicated region
        $region17: #{tpu_custom_call.1} parent=15 // pred_check
          %p187 = pneg %p52
        $region18: #{tpu_custom_call.1} parent=15 // pred_check_branch
          %189 = sbr.rel (%p187) target = $region20
        $region19: #{tpu_custom_call.1} parent=15 // pred_region
          %s190 = sand.u32 %s42, 1
          %s191 = scalar_lea.sflag [#allocation3], %s190
          %s192 = sand.u32 %s42, 1
          %s193 = smul.addr %s192, 4
          %s194 = scalar_lea.vmem [#allocation2], %s193
          %s195 = sadd.s32 %s21, %s22
          %p196 = scmp.lt.s32.totalorder %s195, 0
          %s197 = scalar_select %p196, %s195, 0
          %s199 = ssub.s32 64, 64
          %200 = vsyncadd %s191, %s199
          %s201 = smul.addr %s197, 64
          %s202 = scalar_lea.hbm %s0, %s201
          %s204 = sshll.u32 %s194, 4
          %s205 = int_to_ptr.vmem [resolvable:$true] %s204
          %207 = dma.hbm_to_vmem [thread:$0]  %s202, 64, %s205, %s191
        $region20: #{tpu_custom_call.1} parent=15 // pred_fallthru
          _
        // Predicated region
        $region21: #{tpu_custom_call.1} parent=15 // pred_check
          %p208 = pneg %p84
        $region22: #{tpu_custom_call.1} parent=15 // pred_check_branch
          %210 = sbr.rel (%p208) target = $region24
        $region23: #{tpu_custom_call.1} parent=15 // pred_region
          %s211 = sadd.s32 %s21, %s22
          %p212 = scmp.lt.s32.totalorder %s211, 0
          %s213 = scalar_select %p212, %s211, 0
          %p214 = scmp.lt.s32.totalorder %s213, 0
          %s215 = scalar_select %p214, %s213, 0
          %s216 = scalar_lea.vmem %s1, %s215
          %s217 = sadd.s32 %s21, %s22
          %p218 = scmp.lt.s32.totalorder %s217, 0
          %s219 = scalar_select %p218, %s217, 0
        $region24: #{tpu_custom_call.1} parent=15 // pred_fallthru
          _
      $region16: #{tpu_custom_call.1} parent=5 // pred_fallthru
        _
      %p220 = scmp.le.s32.totalorder 1, %s14
      %p221 = scmp.lt.s32.totalorder %s14, 3
      %p222 = pnand %p220, %p221
      %p223 = pneg %p222
      // Predicated region
      $region25: #{tpu_custom_call.1} parent=5 // pred_check
        _
      $region26: #{tpu_custom_call.1} parent=5 // pred_check_branch
        %225 = sbr.rel (%p222) target = $region28
      $region27: #{tpu_custom_call.1} parent=5 // pred_region
        %s226 = ssub.s32 %s14, 1
        %s227 = sand.u32 %s45, 1
        %s228 = scalar_lea.sflag [#allocation3], %s227
        %s229 = sand.u32 %s45, 1
        %s230 = smul.addr %s229, 4
        %s231 = scalar_lea.vmem [#allocation2], %s230
        // Predicated region
        $region29: #{tpu_custom_call.1} parent=27 // pred_check
          %p232 = pneg %p58
        $region30: #{tpu_custom_call.1} parent=27 // pred_check_branch
          %234 = sbr.rel (%p232) target = $region32
        $region31: #{tpu_custom_call.1} parent=27 // pred_region
          %235 = dma.done %s228, 64
        $region32: #{tpu_custom_call.1} parent=27 // pred_fallthru
          _
        %s236 = sand.u32 %s45, 1
        %s237 = scalar_lea.sflag [#allocation3], %s236
        %s238 = sand.u32 %s45, 1
        %s239 = smul.addr %s238, 4
        %s240 = scalar_lea.vmem [#allocation2], %s239
        %p241 = pneg %p58
        %p242 = pneg %p55
        %s243 = sadd.s32 %s23, %s24
        %p244 = scmp.lt.s32.totalorder %s243, 0
        %s245 = scalar_select %p244, %s243, 0
        %p246 = scmp.lt.s32.totalorder %s245, 0
        %s247 = scalar_select %p246, %s245, 0
        %s248 = scalar_lea.vmem %s1, %s247
        %p249 = pneg %p90
        %p250 = pneg %p87
        %p251 = pneg %p116
        %p252 = pneg %p113
        %p253 = scmp.lt.s32.totalorder %s23, 1
        %s254 = scalar_select %p253, %s23, 1
        %s255 = smul.addr %s254, 4
        %s256 = scalar_lea.vmem %s2, %s255
        %p257 = pneg %p142
        %p258 = pneg %p139
        %p259 = scmp.lt.s32.totalorder %s23, 1
        %s260 = scalar_select %p259, %s23, 1
        %s261 = smul.addr %s260, 4
        %s262 = scalar_lea.vmem %s3, %s261
        %p263 = pneg %p168
        %p264 = pneg %p165
        %p265 = scmp.lt.s32.totalorder %s23, 1
        %s266 = scalar_select %p265, %s23, 1
        %s267 = smul.addr %s266, 4
        %s268 = scalar_lea.vmem %s4, %s267
        %s269 = sadd.s32 %s23, %s24
        %p270 = scmp.lt.s32.totalorder %s269, 0
        %s271 = scalar_select %p270, %s269, 0
        %s272 = sadd.s32 %s23, %s24
        %p273 = scmp.lt.s32.totalorder %s272, 0
        %s274 = scalar_select %p273, %s272, 0
        %p275 = scmp.lt.s32.totalorder %s274, 0
        %s276 = scalar_select %p275, %s274, 0
        %s277 = scalar_lea.vmem %s1, %s276
        %s278 = sadd.s32 %s23, %s24
        %p279 = scmp.lt.s32.totalorder %s278, 0
        %s280 = scalar_select %p279, %s278, 0
        %p281 = scmp.lt.s32.totalorder %s23, 1
        %s282 = scalar_select %p281, %s23, 1
        %s283 = smul.addr %s282, 4
        %s284 = scalar_lea.vmem %s2, %s283
        %p285 = scmp.lt.s32.totalorder %s23, 1
        %s286 = scalar_select %p285, %s23, 1
        %s287 = smul.addr %s286, 4
        %s288 = scalar_lea.vmem %s3, %s287
        %p289 = scmp.lt.s32.totalorder %s23, 1
        %s290 = scalar_select %p289, %s23, 1
        %s291 = smul.addr %s290, 4
        %s292 = scalar_lea.vmem %s4, %s291
        %s293 = sadd.s32 %s23, %s24
        %p294 = scmp.eq.s32.totalorder %s24, 0
        // Predicated region
        $region33: #{tpu_custom_call.1} parent=27 // pred_check
          %p295 = pneg %p294
        $region34: #{tpu_custom_call.1} parent=27 // pred_check_branch
          %297 = sbr.rel (%p295) target = $region36
        $region35: #{tpu_custom_call.1} parent=27 // pred_region
          %vm298 = vcmask 3072
          %299 = vst.msk [vmem:[%s284] sm:$0xf] %vm298, 0.0
          %300 = vst.msk [vmem:[%s288] sm:$0xf] %vm298, 0.0
          %301 = vst.msk [vmem:[%s292] sm:$0xf] %vm298, 0.0
        $region36: #{tpu_custom_call.1} parent=27 // pred_fallthru
          _
        %v302 = vld [vmem:[%s231] sm:$0xf]
        %v303 = vld [vmem:[%s277] sm:$0x1]
        %vm304 = vcmask 1043456
        %v305 = vsel %vm304, %v302, -inf
        %v306 = vrot.slane %v305, 4
        %v307 = vmax.f32 %v305, %v306
        %v308 = vrot.slane %v307, 2
        %v309 = vmax.f32 %v307, %v308
        %v310 = vrot.slane %v309, 1
        %v311 = vmax.f32 %v309, %v310
        %v312 = vsub.f32 %v302, %v311
        %v313 = vmul.f32 %v312, 1.442695
        %v314 = vpow.pop %v313
        %v315 = vsel %vm304, %v314, 0.0
        %v316 = vrot.slane %v315, 4
        %v317 = vadd.f32 %v315, %v316
        %v318 = vrot.slane %v317, 2
        %v319 = vadd.f32 %v317, %v318
        %v320 = vrot.slane %v319, 1
        %v321 = vadd.f32 %v319, %v320
        %v322 = vrcp.pop %v321
        %v323 = vmul.f32 %v321, %v322
        %v324 = vsub.f32 2.0, %v323
        %v325 = vmul.f32 %v322, %v324
        %v326 = vmul.f32 %v314, %v325
        %v327 = vlaneseq
        %v328 = vshrl.u32 %v327, 7
        %v329 = vlaneseq
        %v330 = vshrl.u32 %v329, 7
        %v331 = vsub.s32 0, %v330
        %v332 = vrot.slane %v303, %v331
        %vm333 = vcmp.eq.s32.totalorder %v328, %v332
        %s334 = sadd.s32 %s293, 1
        %s335 = smul.u32 %s334, 128
        %p336 = scmp.le.s32.totalorder %s335, 8
        // Predicated region
        $region37: #{tpu_custom_call.1} parent=27 // pred_check
          %p337 = pneg %p336
        $region38: #{tpu_custom_call.1} parent=27 // pred_check_branch
          %339 = sbr.rel (%p337) target = $region40
        $region39: #{tpu_custom_call.1} parent=27 // pred_region
          %v340 = vsel %vm333, 1, 0
          %v341 = vcvt.s32.f32 %v340
          %v342 = vld [vmem:[%s284] sm:$0xf]
          %v343 = vmul.f32 %v326, %v341
          %v344 = vsel %vm304, %v343, 0.0
          %345 = vadd.xlane.f32.xlu0 %v344
          %v346 = vpop.xlane.xlu0 %345
          %v347 = vadd.f32 %v342, %v346
          %vm348 = vcmask 3072
          %349 = vst.msk [vmem:[%s284] sm:$0xf] %vm348, %v347
          %v350 = vld [vmem:[%s288] sm:$0xf]
          %v351 = vsel %vm304, %v326, 0.0
          %352 = vadd.xlane.f32.xlu0 %v351
          %v353 = vpop.xlane.xlu0 %352
          %v354 = vadd.f32 %v350, %v353
          %355 = vst.msk [vmem:[%s288] sm:$0xf] %vm348, %v354
          %v356 = vld [vmem:[%s292] sm:$0xf]
          %v357 = vsel %vm304, %v341, 0.0
          %358 = vadd.xlane.f32.xlu0 %v357
          %v359 = vpop.xlane.xlu0 %358
          %v360 = vadd.f32 %v356, %v359
          %361 = vst.msk [vmem:[%s292] sm:$0xf] %vm348, %v360
        $region40: #{tpu_custom_call.1} parent=27 // pred_fallthru
          _
        %p362 = scmp.gt.s32.totalorder %s335, 8
        // Predicated region
        $region41: #{tpu_custom_call.1} parent=27 // pred_check
          %p363 = pneg %p362
        $region42: #{tpu_custom_call.1} parent=27 // pred_check_branch
          %365 = sbr.rel (%p363) target = $region44
        $region43: #{tpu_custom_call.1} parent=27 // pred_region
          %v366 = vlaneseq
          %v367 = vand.u32 %v366, 127
          %s368 = smul.u32 %s293, 128
          %v369 = vstv %s368
          %v370 = vadd.s32 %v367, %v369
          %vm371 = vcmp.lt.s32.totalorder %v370, 8
          %v372 = vsel %vm371, 1, 0
          %vm373 = vcmp.eq.s32.totalorder %v372, 1
          %v374 = vsel %vm373, %v326, 0.0
          %vm375 = vmand %vm373, %vm333
          %v376 = vsel %vm375, 1.0, 0.0
          %v377 = vld [vmem:[%s284] sm:$0xf]
          %v378 = vmul.f32 %v374, %v376
          %v379 = vsel %vm304, %v378, 0.0
          %380 = vadd.xlane.f32.xlu0 %v379
          %v381 = vpop.xlane.xlu0 %380
          %v382 = vadd.f32 %v377, %v381
          %vm383 = vcmask 3072
          %384 = vst.msk [vmem:[%s284] sm:$0xf] %vm383, %v382
          %v385 = vld [vmem:[%s288] sm:$0xf]
          %v386 = vsel %vm304, %v374, 0.0
          %387 = vadd.xlane.f32.xlu0 %v386
          %v388 = vpop.xlane.xlu0 %387
          %v389 = vadd.f32 %v385, %v388
          %390 = vst.msk [vmem:[%s288] sm:$0xf] %vm383, %v389
          %v391 = vld [vmem:[%s292] sm:$0xf]
          %v392 = vsel %vm304, %v376, 0.0
          %393 = vadd.xlane.f32.xlu0 %v392
          %v394 = vpop.xlane.xlu0 %393
          %v395 = vadd.f32 %v391, %v394
          %396 = vst.msk [vmem:[%s292] sm:$0xf] %vm383, %v395
        $region44: #{tpu_custom_call.1} parent=27 // pred_fallthru
          _
        %p397 = scmp.lt.s32.totalorder %s23, 1
        %s398 = scalar_select %p397, %s23, 1
        %s399 = smul.addr %s398, 4
        %s400 = scalar_lea.vmem %s2, %s399
        %p401 = scmp.lt.s32.totalorder %s23, 1
        %s402 = scalar_select %p401, %s23, 1
        %s403 = smul.addr %s402, 4
        %s404 = scalar_lea.vmem %s3, %s403
        %p405 = scmp.lt.s32.totalorder %s23, 1
        %s406 = scalar_select %p405, %s23, 1
        %s407 = smul.addr %s406, 4
        %s408 = scalar_lea.vmem %s4, %s407
        // Predicated region
        $region45: #{tpu_custom_call.1} parent=27 // pred_check
          %p409 = pneg %p113
        $region46: #{tpu_custom_call.1} parent=27 // pred_check_branch
          %411 = sbr.rel (%p409) target = $region48
        $region47: #{tpu_custom_call.1} parent=27 // pred_region
          _
        $region48: #{tpu_custom_call.1} parent=27 // pred_fallthru
          _
        // Predicated region
        $region49: #{tpu_custom_call.1} parent=27 // pred_check
          %p412 = pneg %p139
        $region50: #{tpu_custom_call.1} parent=27 // pred_check_branch
          %414 = sbr.rel (%p412) target = $region52
        $region51: #{tpu_custom_call.1} parent=27 // pred_region
          _
        $region52: #{tpu_custom_call.1} parent=27 // pred_fallthru
          _
        // Predicated region
        $region53: #{tpu_custom_call.1} parent=27 // pred_check
          %p415 = pneg %p165
        $region54: #{tpu_custom_call.1} parent=27 // pred_check_branch
          %417 = sbr.rel (%p415) target = $region56
        $region55: #{tpu_custom_call.1} parent=27 // pred_region
          _
        $region56: #{tpu_custom_call.1} parent=27 // pred_fallthru
          _
      $region28: #{tpu_custom_call.1} parent=5 // pred_fallthru
        _
      %p418 = scmp.le.s32.totalorder 2, %s14
      // Predicated region
      $region57: #{tpu_custom_call.1} parent=5 // pred_check
        %p419 = pneg %p418
      $region58: #{tpu_custom_call.1} parent=5 // pred_check_branch
        %421 = sbr.rel (%p419) target = $region60
      $region59: #{tpu_custom_call.1} parent=5 // pred_region
        %s422 = ssub.s32 %s14, 2
        // Predicated region
        $region61: #{tpu_custom_call.1} parent=59 // pred_check
          %p423 = pneg %p119
        $region62: #{tpu_custom_call.1} parent=59 // pred_check_branch
          %425 = sbr.rel (%p423) target = $region64
        $region63: #{tpu_custom_call.1} parent=59 // pred_region
          %p426 = scmp.lt.s32.totalorder %s25, 1
          %s427 = scalar_select %p426, %s25, 1
          %s428 = smul.addr %s427, 4
          %s429 = scalar_lea.vmem %s2, %s428
        $region64: #{tpu_custom_call.1} parent=59 // pred_fallthru
          _
        // Predicated region
        $region65: #{tpu_custom_call.1} parent=59 // pred_check
          %p430 = pneg %p145
        $region66: #{tpu_custom_call.1} parent=59 // pred_check_branch
          %432 = sbr.rel (%p430) target = $region68
        $region67: #{tpu_custom_call.1} parent=59 // pred_region
          %p433 = scmp.lt.s32.totalorder %s25, 1
          %s434 = scalar_select %p433, %s25, 1
          %s435 = smul.addr %s434, 4
          %s436 = scalar_lea.vmem %s3, %s435
        $region68: #{tpu_custom_call.1} parent=59 // pred_fallthru
          _
        // Predicated region
        $region69: #{tpu_custom_call.1} parent=59 // pred_check
          %p437 = pneg %p171
        $region70: #{tpu_custom_call.1} parent=59 // pred_check_branch
          %439 = sbr.rel (%p437) target = $region72
        $region71: #{tpu_custom_call.1} parent=59 // pred_region
          %p440 = scmp.lt.s32.totalorder %s25, 1
          %s441 = scalar_select %p440, %s25, 1
          %s442 = smul.addr %s441, 4
          %s443 = scalar_lea.vmem %s4, %s442
        $region72: #{tpu_custom_call.1} parent=59 // pred_fallthru
          _
      $region60: #{tpu_custom_call.1} parent=5 // pred_fallthru
        _
    $region6: #{tpu_custom_call.1} parent=1 // loop_footer
      %s18 = sadd.s32 1, %s14
    $region7: #{tpu_custom_call.1} parent=1 // loop_footer_branch
      %13 = sbr.rel target = $region3
    $region8: #{tpu_custom_call.1} parent=1 // loop_exit
      _
    %444 = vsyncpa [#allocation3], 1
    %s445 = scalar_lea.sflag [#allocation3], 1
    %446 = vsyncpa %s445, 1

</llo_original>
